<compile_context>
chip_gen: v7x
topology: tpu7x:2x2x1
jax: 0.10.0
libtpu: 0.0.40
codegen_flags: <defaults>
</compile_context>

<pallas_src>
import jax
import jax.numpy as jnp
from jax.experimental import pallas as pl
from jax.experimental.pallas import tpu as pltpu


def _round_up(x, m):
    return ((x + m - 1) // m) * m


def _sigmoid(z):
    # 1 / (1 + exp(-z)); exp -> EUP, approx reciprocal -> near-free (vrcp).
    return pl.reciprocal(1.0 + jnp.exp(-z), approx=True)


def _linrelu_kernel_2d(x_ref, w_ref, b_ref, o_ref):
    """Single-K-tile path: one MXU pass + bias + sigmoid per (i, j) tile."""
    x = jnp.maximum(x_ref[...], 0.0)                                   # ReLU (VPU), stays bf16
    acc = jnp.dot(x, w_ref[...], preferred_element_type=jnp.float32)  # MXU, f32 accumulate
    acc = acc + b_ref[...].astype(jnp.float32)
    o_ref[...] = _sigmoid(acc).astype(o_ref.dtype)


def _linrelu_kernel_3d(x_ref, w_ref, b_ref, o_ref, acc_ref):
    """Multi-K-tile path: accumulate over k; bias + sigmoid once in the epilogue."""
    k = pl.program_id(2)

    @pl.when(k == 0)
    def _init():
        acc_ref[...] = jnp.zeros_like(acc_ref)

    x = jnp.maximum(x_ref[...], 0.0)
    acc_ref[...] += jnp.dot(x, w_ref[...], preferred_element_type=jnp.float32)

    @pl.when(k == pl.num_programs(2) - 1)
    def _epilogue():
        acc = acc_ref[...] + b_ref[...].astype(jnp.float32)
        o_ref[...] = _sigmoid(acc).astype(o_ref.dtype)


def lin_relu_block(x, w, b):
    """sigmoid(relu(x) @ w + b).  x: (B, in_ch), w: (in_ch, out_ch), b: (out_ch,)."""
    M, K = x.shape
    Kw, N = w.shape
    assert Kw == K and b.shape == (N,)
    out_dtype = x.dtype

    # ---- tile selection (bf16 operands, f32 accumulation) ----
    # tn: multiple of 256 keeps the 256-wide MXU (v6e/v7x) full; 512 for big N
    # halves x re-streams (x is read once per j tile).
    tn = 512 if N >= 1024 else 256
    N_pad = _round_up(N, tn)
    # tm: single sublane-aligned i tile for small batch, 512 otherwise
    # (bigger tm -> fewer W re-streams).
    if M <= 512:
        tm = _round_up(M, 8)
        M_pad = tm
    else:
        tm = 512
        M_pad = _round_up(M, tm)
    # tk: single k tile (2-D grid, no accumulator) whenever K fits; else stream
    # K in 2048-wide chunks (k innermost, "arbitrary").
    SINGLE_K_MAX = 4096
    if K <= SINGLE_K_MAX:
        tk = _round_up(K, 128)
        K_pad = tk
    else:
        tk = 2048
        K_pad = _round_up(K, tk)
    grid_i, grid_j, grid_k = M_pad // tm, N_pad // tn, K_pad // tk

    # bf16 operands: full-rate MXU + half the HBM DMA bytes; f32 accumulation
    # preserves ~1e-3 agreement with the f32 module.
    x_p = x.astype(jnp.bfloat16)
    w_p = w.astype(jnp.bfloat16)
    # Zero padding is matmul-safe (relu(0)=0 along K; padded M/N sliced off).
    if M_pad != M or K_pad != K:
        x_p = jnp.pad(x_p, ((0, M_pad - M), (0, K_pad - K)))
    if K_pad != K or N_pad != N:
        w_p = jnp.pad(w_p, ((0, K_pad - K), (0, N_pad - N)))
    b_p = jnp.pad(b.astype(jnp.float32), (0, N_pad - N)).reshape(1, N_pad)

    out_itemsize = jnp.dtype(out_dtype).itemsize
    cost = pl.CostEstimate(
        flops=2 * M_pad * K_pad * N_pad,
        transcendentals=M_pad * N_pad,
        # k innermost: x re-streamed once per j tile, W once per i tile.
        bytes_accessed=(2 * M_pad * K_pad * grid_j
                        + 2 * K_pad * N_pad * grid_i
                        + 4 * N_pad
                        + M_pad * N_pad * out_itemsize),
    )
    VMEM_LIMIT = 48 * 1024 * 1024  # above 32 MiB default scope, safe on v7x's 64 MiB

    if grid_k == 1:
        out_p = pl.pallas_call(
            _linrelu_kernel_2d,
            out_shape=jax.ShapeDtypeStruct((M_pad, N_pad), out_dtype),
            grid_spec=pltpu.PrefetchScalarGridSpec(
                num_scalar_prefetch=0,
                grid=(grid_i, grid_j),
                in_specs=[
                    pl.BlockSpec((tm, tk), lambda i, j: (i, 0)),   # x tile
                    pl.BlockSpec((tk, tn), lambda i, j: (0, j)),   # W tile
                    pl.BlockSpec((1, tn), lambda i, j: (0, j)),    # bias tile
                ],
                out_specs=pl.BlockSpec((tm, tn), lambda i, j: (i, j)),
            ),
            compiler_params=pltpu.CompilerParams(
                dimension_semantics=("parallel", "parallel"),
                vmem_limit_bytes=VMEM_LIMIT,
            ),
            cost_estimate=cost,
        )(x_p, w_p, b_p)
    else:
        out_p = pl.pallas_call(
            _linrelu_kernel_3d,
            out_shape=jax.ShapeDtypeStruct((M_pad, N_pad), out_dtype),
            grid_spec=pltpu.PrefetchScalarGridSpec(
                num_scalar_prefetch=0,
                grid=(grid_i, grid_j, grid_k),
                in_specs=[
                    pl.BlockSpec((tm, tk), lambda i, j, k: (i, k)),   # x tile
                    pl.BlockSpec((tk, tn), lambda i, j, k: (k, j)),   # W tile
                    pl.BlockSpec((1, tn), lambda i, j, k: (0, j)),    # bias tile
                ],
                out_specs=pl.BlockSpec((tm, tn), lambda i, j, k: (i, j)),
                scratch_shapes=[pltpu.VMEM((tm, tn), jnp.float32)],
            ),
            compiler_params=pltpu.CompilerParams(
                dimension_semantics=("parallel", "parallel", "arbitrary"),
                vmem_limit_bytes=VMEM_LIMIT,
            ),
            cost_estimate=cost,
        )(x_p, w_p, b_p)

    if M_pad != M or N_pad != N:
        out_p = out_p[:M, :N]
    return out_p


if __name__ == "__main__":
    key = jax.random.PRNGKey(0)

    def run_case(B, in_ch, out_ch, case_key):
        kx, kw, kb = jax.random.split(case_key, 3)
        x = jax.random.normal(kx, (B, in_ch), dtype=jnp.float32)
        # Deterministic init mimicking nn.Linear's uniform(-1/sqrt(in), 1/sqrt(in)).
        bound = 1.0 / jnp.sqrt(jnp.float32(in_ch))
        w = jax.random.uniform(kw, (in_ch, out_ch), jnp.float32, -bound, bound)
        b = jax.random.uniform(kb, (out_ch,), jnp.float32, -bound, bound)

        out = lin_relu_block(x, w, b)
        jax.block_until_ready(out)

        ref = jax.nn.sigmoid(
            jnp.dot(jnp.maximum(x, 0.0), w, precision=jax.lax.Precision.HIGHEST) + b
        )
        assert out.shape == (B, out_ch)
        # bf16 operands / f32 accumulation vs. f32 reference -> ~1e-3 agreement.
        assert jnp.allclose(out, ref, atol=3e-3, rtol=3e-3), (B, in_ch, out_ch)

    k1, k2, k3 = jax.random.split(key, 3)
    # Tiny (module-scale): padding in every dim, single-tile 2-D grid.
    run_case(10, 36, 40, k1)
    # Modest: single-K-tile 2-D grid, N padded 384->512 with tn=256 (2 parallel j tiles).
    run_case(256, 1024, 384, k2)
    # Long-K: exercises the 3-D grid path with the f32 accumulator + epilogue.
    run_case(64, 8192, 40, k3)

    print("KERNEL_OK")
</pallas_src>

<mosaic_0001>
module attributes {stable_mosaic.version = 11 : i64} {
  func.func @_linrelu_kernel_2d(%arg0: i32, %arg1: i32, %arg2: memref<16x128xbf16, #tpu.memory_space<vmem>>, %arg3: memref<128x256xbf16, #tpu.memory_space<vmem>>, %arg4: memref<1x256xf32, #tpu.memory_space<vmem>>, %arg5: memref<16x256xf32, #tpu.memory_space<vmem>>) attributes {dimension_semantics = [#tpu.dimension_semantics<parallel>, #tpu.dimension_semantics<parallel>], iteration_bounds = array<i64: 1, 1>, scalar_prefetch = 0 : i64, scratch_operands = 0 : i64, tpu.core_type = #tpu.core_type<tc>, window_params = [{transform_indices = @transform_0, window_bounds = array<i64: 16, 128>}, {transform_indices = @transform_1, window_bounds = array<i64: 128, 256>}, {transform_indices = @transform_2, window_bounds = array<i64: 1, 256>}, {transform_indices = @transform_3, window_bounds = array<i64: 16, 256>}]} {
    %c0 = arith.constant 0 : index
    %c0_0 = arith.constant 0 : index
    %0 = vector.load %arg2[%c0, %c0_0] : memref<16x128xbf16, #tpu.memory_space<vmem>>, vector<16x128xbf16>
    %cst = arith.constant 0.000000e+00 : bf16
    %1 = vector.broadcast %cst : bf16 to vector<16x128xbf16>
    %2 = arith.maximumf %0, %1 : vector<16x128xbf16>
    %c0_1 = arith.constant 0 : index
    %c0_2 = arith.constant 0 : index
    %3 = vector.load %arg3[%c0_1, %c0_2] : memref<128x256xbf16, #tpu.memory_space<vmem>>, vector<128x256xbf16>
    %cst_3 = arith.constant dense<0.000000e+00> : vector<16x256xf32>
    %4 = tpu.matmul %2, %3, %cst_3 {dimension_numbers = #tpu.dot_dimension_numbers<[1], [0], [0], [1], [0, 0, 1, 1], [], []>} : vector<16x128xbf16>, vector<128x256xbf16>, vector<16x256xf32> -> vector<16x256xf32>
    %c0_4 = arith.constant 0 : index
    %c0_5 = arith.constant 0 : index
    %5 = vector.load %arg4[%c0_4, %c0_5] : memref<1x256xf32, #tpu.memory_space<vmem>>, vector<1x256xf32>
    %6 = vector.broadcast %5 : vector<1x256xf32> to vector<16x256xf32>
    %7 = arith.addf %4, %6 : vector<16x256xf32>
    %cst_6 = arith.constant 0.000000e+00 : f32
    %8 = vector.broadcast %cst_6 : f32 to vector<16x256xf32>
    %9 = arith.subf %8, %7 : vector<16x256xf32>
    %10 = math.exp %9 : vector<16x256xf32>
    %cst_7 = arith.constant 1.000000e+00 : f32
    %11 = vector.broadcast %cst_7 : f32 to vector<16x256xf32>
    %12 = arith.addf %11, %10 : vector<16x256xf32>
    %13 = tpu.reciprocal %12 {approx = true} : vector<16x256xf32> -> vector<16x256xf32>
    %c0_8 = arith.constant 0 : index
    %c0_9 = arith.constant 0 : index
    %14 = vector.load %arg5[%c0_8, %c0_9] : memref<16x256xf32, #tpu.memory_space<vmem>>, vector<16x256xf32>
    tpu.vector_store %arg5[%c0_8, %c0_9], %13 {strides = array<i32>} : memref<16x256xf32, #tpu.memory_space<vmem>>, vector<16x256xf32>,
    return
  }
  func.func @transform_0(%arg0: i32, %arg1: i32) -> (i32, i32) {
    %c0_i32 = arith.constant 0 : i32
    %c0_i32_0 = arith.constant 0 : i32
    return %arg0, %c0_i32 : i32, i32
  }
  func.func @transform_1(%arg0: i32, %arg1: i32) -> (i32, i32) {
    %c0_i32 = arith.constant 0 : i32
    %c0_i32_0 = arith.constant 0 : i32
    return %c0_i32, %arg1 : i32, i32
  }
  func.func @transform_2(%arg0: i32, %arg1: i32) -> (i32, i32) {
    %c0_i32 = arith.constant 0 : i32
    %c0_i32_0 = arith.constant 0 : i32
    return %c0_i32, %arg1 : i32, i32
  }
  func.func @transform_3(%arg0: i32, %arg1: i32) -> (i32, i32) {
    %c0_i32 = arith.constant 0 : i32
    return %arg0, %arg1 : i32, i32
  }
}

</mosaic_0001>

<llo_original>
// kernel: tpu_custom_call.1
$region0: #{tpu_custom_call.1}
  #allocation0 [shape = 'u32[]', space=smem, size = 0x4, offset = 0x4, fixed_abs, tag = 'smem constant byte address 0x4 - core index']
  #allocation1 [shape = 'u32[144,128]{1,0:T(1,128)}', space=vmem, size = 0x12000, scoped, tag = 'internal scratch']
  %s0 = inlined_call_operand.hbm [shape: bf16[16,128], index: 0, kind: input, shape index: {}]
  %s1 = inlined_call_operand.hbm [shape: bf16[128,256], index: 1, kind: input, shape index: {}]
  %s2 = inlined_call_operand.vmem [shape: f32[1,256], index: 2, kind: input, shape index: {}]
  %s3 = inlined_call_operand.hbm [shape: f32[16,256], index: 3, kind: output, shape index: {}]
  %s4 = sld [smem:[#allocation0]]
  $region30: #{tpu_custom_call.1} parent=0
    _
  %s6 = ssub.s32 1, %s4
  %s7 = scalar_select 0, %s6, %s4
  $region1: #{tpu_custom_call.1} parent=0
    #allocation2 [shape = 'u8[4096]{0}', space=vmem, size = 0x1000, scoped, tag = 'input window, operand 0, single buffered']
    #allocation3 [shape = 's32[1]{0}', space=sflag, size = 0x4, scoped, tag = 'scoped memory for tpu_custom_call.1']
    #allocation4 [shape = 's32[1]{0}', space=sflag, size = 0x4, scoped, tag = 'scoped memory for tpu_custom_call.1']
    #allocation5 [shape = 'u8[65536]{0}', space=vmem, size = 0x10000, scoped, tag = 'input window, operand 1, single buffered']
    #allocation6 [shape = 's32[1]{0}', space=sflag, size = 0x4, scoped, tag = 'scoped memory for tpu_custom_call.1']
    #allocation7 [shape = 'u8[16384]{0}', space=vmem, size = 0x4000, scoped, tag = 'output window, operand 0, single buffered']
    %8 = vsyncpa [#allocation3], 0
    %9 = vsyncpa [#allocation6], 0
    %10 = vsyncpa [#allocation4], 0
    // Predicated region
    $region2: #{tpu_custom_call.1} parent=1 // pred_check
      _
    $region3: #{tpu_custom_call.1} parent=1 // pred_check_branch
      %12 = sbr.rel (0) target = $region5
    $region4: #{tpu_custom_call.1} parent=1 // pred_region
      %s14 = ssub.s32 128, 128
      %15 = vsyncadd [#allocation3], %s14
      %s16 = sshll.u32 [#allocation2], 4
      %s17 = int_to_ptr.vmem [resolvable:$true] %s16
      %22 = dma.hbm_to_vmem [thread:$0]  %s0, 128, %s17, [#allocation3], 64, 64, 4
    $region5: #{tpu_custom_call.1} parent=1 // pred_fallthru
      _
    // Predicated region
    $region6: #{tpu_custom_call.1} parent=1 // pred_check
      _
    $region7: #{tpu_custom_call.1} parent=1 // pred_check_branch
      %24 = sbr.rel (0) target = $region9
    $region8: #{tpu_custom_call.1} parent=1 // pred_region
      %s26 = ssub.s32 2048, 2048
      %27 = vsyncadd [#allocation6], %s26
      %s28 = sshll.u32 [#allocation5], 4
      %s29 = int_to_ptr.vmem [resolvable:$true] %s28
      %34 = dma.hbm_to_vmem [thread:$0]  %s1, 2048, %s29, [#allocation6], 128, 128, 8
    $region9: #{tpu_custom_call.1} parent=1 // pred_fallthru
      _
    // Predicated region
    $region10: #{tpu_custom_call.1} parent=1 // pred_check
      _
    $region11: #{tpu_custom_call.1} parent=1 // pred_check_branch
      %36 = sbr.rel (0) target = $region13
    $region12: #{tpu_custom_call.1} parent=1 // pred_region
      _
    $region13: #{tpu_custom_call.1} parent=1 // pred_fallthru
      _
    // Predicated region
    $region14: #{tpu_custom_call.1} parent=1 // pred_check
      _
    $region15: #{tpu_custom_call.1} parent=1 // pred_check_branch
      %38 = sbr.rel (0) target = $region17
    $region16: #{tpu_custom_call.1} parent=1 // pred_region
      %39 = dma.done [#allocation3], 128
    $region17: #{tpu_custom_call.1} parent=1 // pred_fallthru
      _
    // Predicated region
    $region18: #{tpu_custom_call.1} parent=1 // pred_check
      _
    $region19: #{tpu_custom_call.1} parent=1 // pred_check_branch
      %41 = sbr.rel (0) target = $region21
    $region20: #{tpu_custom_call.1} parent=1 // pred_region
      %42 = dma.done [#allocation6], 2048
    $region21: #{tpu_custom_call.1} parent=1 // pred_fallthru
      _
    %v44 = vld [vmem:[#allocation2] sm:$0xf]
    %v45 = vld [vmem:[#allocation2 + $0x4] sm:$0xf]
    %v46 = vmax.bf16 %v44, 0
    %v47 = vmax.bf16 %v45, 0
    %v48 = vld [vmem:[#allocation5] sm:$0xff]
    %v49 = vld [vmem:[#allocation5 + $0x8] sm:$0xff]
    %v50 = vld [vmem:[#allocation5 + $0x10] sm:$0xff]
    %v51 = vld [vmem:[#allocation5 + $0x18] sm:$0xff]
    %v52 = vld [vmem:[#allocation5 + $0x20] sm:$0xff]
    %v53 = vld [vmem:[#allocation5 + $0x28] sm:$0xff]
    %v54 = vld [vmem:[#allocation5 + $0x30] sm:$0xff]
    %v55 = vld [vmem:[#allocation5 + $0x38] sm:$0xff]
    %v56 = vld [vmem:[#allocation5 + $0x40] sm:$0xff]
    %v57 = vld [vmem:[#allocation5 + $0x48] sm:$0xff]
    %v58 = vld [vmem:[#allocation5 + $0x50] sm:$0xff]
    %v59 = vld [vmem:[#allocation5 + $0x58] sm:$0xff]
    %v60 = vld [vmem:[#allocation5 + $0x60] sm:$0xff]
    %v61 = vld [vmem:[#allocation5 + $0x68] sm:$0xff]
    %v62 = vld [vmem:[#allocation5 + $0x70] sm:$0xff]
    %v63 = vld [vmem:[#allocation5 + $0x78] sm:$0xff]
    %v64 = vld [vmem:[%s2] sm:$0x3]
    %v66 = vlaneseq
    %v67 = vshrl.u32 %v66, 7
    %v68 = vsub.s32 0, %v67
    %v69 = vrot.slane %v64, %v68
    %v70 = vlaneseq
    %v71 = vshrl.u32 %v70, 7
    %v72 = vsub.s32 1, %v71
    %v73 = vrot.slane %v64, %v72
    %v78 = vunpack.c.l.b16 %v46
    %v79 = vunpack.c.l.b16 %v47
    %v80 = vpack.c.b16 %v79, %v78
    %v98 = vunpack.c.l.b16 %v48
    %v99 = vunpack.c.h.b16 %v48
    %v100 = vunpack.c.l.b16 %v49
    %v101 = vunpack.c.h.b16 %v49
    %v102 = vunpack.c.l.b16 %v50
    %v103 = vunpack.c.h.b16 %v50
    %v104 = vunpack.c.l.b16 %v51
    %v105 = vunpack.c.h.b16 %v51
    %v106 = vunpack.c.l.b16 %v52
    %v107 = vunpack.c.h.b16 %v52
    %v108 = vunpack.c.l.b16 %v53
    %v109 = vunpack.c.h.b16 %v53
    %v110 = vunpack.c.l.b16 %v54
    %v111 = vunpack.c.h.b16 %v54
    %v112 = vunpack.c.l.b16 %v55
    %v113 = vunpack.c.h.b16 %v55
    %v114 = vunpack.c.l.b16 %v56
    %v115 = vunpack.c.h.b16 %v56
    %v116 = vunpack.c.l.b16 %v57
    %v117 = vunpack.c.h.b16 %v57
    %v118 = vunpack.c.l.b16 %v58
    %v119 = vunpack.c.h.b16 %v58
    %v120 = vunpack.c.l.b16 %v59
    %v121 = vunpack.c.h.b16 %v59
    %v122 = vunpack.c.l.b16 %v60
    %v123 = vunpack.c.h.b16 %v60
    %v124 = vunpack.c.l.b16 %v61
    %v125 = vunpack.c.h.b16 %v61
    %v126 = vunpack.c.l.b16 %v62
    %v127 = vunpack.c.h.b16 %v62
    %v128 = vunpack.c.l.b16 %v63
    %v129 = vunpack.c.h.b16 %v63
    %v130 = vpack.c.b16 %v100, %v98
    %v131 = vpack.c.b16 %v101, %v99
    %v132 = vpack.c.b16 %v104, %v102
    %v133 = vpack.c.b16 %v105, %v103
    %v134 = vpack.c.b16 %v108, %v106
    %v135 = vpack.c.b16 %v109, %v107
    %v136 = vpack.c.b16 %v112, %v110
    %v137 = vpack.c.b16 %v113, %v111
    %v138 = vpack.c.b16 %v116, %v114
    %v139 = vpack.c.b16 %v117, %v115
    %v140 = vpack.c.b16 %v120, %v118
    %v141 = vpack.c.b16 %v121, %v119
    %v142 = vpack.c.b16 %v124, %v122
    %v143 = vpack.c.b16 %v125, %v123
    %v144 = vpack.c.b16 %v128, %v126
    %v145 = vpack.c.b16 %v129, %v127
    %162 = vmatprep.subr.bf16.mxu0 %v131
    %163 = vmatpush1.bf16.msra.mxu0 %v130
    %164 = vmatprep.subr.bf16.mxu0 %v133
    %165 = vmatpush1.bf16.msra.mxu0 %v132
    %166 = vmatprep.subr.bf16.mxu0 %v135
    %167 = vmatpush1.bf16.msra.mxu0 %v134
    %168 = vmatprep.subr.bf16.mxu0 %v137
    %169 = vmatpush1.bf16.msra.mxu0 %v136
    %170 = vmatprep.subr.bf16.mxu0 %v139
    %171 = vmatpush1.bf16.msra.mxu0 %v138
    %172 = vmatprep.subr.bf16.mxu0 %v141
    %173 = vmatpush1.bf16.msra.mxu0 %v140
    %174 = vmatprep.subr.bf16.mxu0 %v143
    %175 = vmatpush1.bf16.msra.mxu0 %v142
    %176 = vmatprep.subr.bf16.mxu0 %v145
    %177 = vmatpush1.bf16.msra.mxu0 %v144
    %178 = vmatprep.subr.bf16.mxu0 0
    %179 = vmatpush1.bf16.msra.mxu0 0
    %180 = vmatprep.subr.bf16.mxu0 0
    %181 = vmatpush1.bf16.msra.mxu0 0
    %182 = vmatprep.subr.bf16.mxu0 0
    %183 = vmatpush1.bf16.msra.mxu0 0
    %184 = vmatprep.subr.bf16.mxu0 0
    %185 = vmatpush1.bf16.msra.mxu0 0
    %186 = vmatprep.subr.bf16.mxu0 0
    %187 = vmatpush1.bf16.msra.mxu0 0
    %188 = vmatprep.subr.bf16.mxu0 0
    %189 = vmatpush1.bf16.msra.mxu0 0
    %190 = vmatprep.subr.bf16.mxu0 0
    %191 = vmatpush1.bf16.msra.mxu0 0
    %192 = vmatprep.subr.bf16.mxu0 0
    %193 = vmatpush1.bf16.msra.mxu0 0
    %194 = vmatprep.mubr.bf16.mxu0 0
    %195 = vmatmul.mubr.bf16.gmra.mrb[0].mxu0 %v80
    %v196 = vpop.f32.mrb[0].mxu0
    %v197 = vadd.f32 %v69, %v196
    %v198 = vpop.f32.mrb[0].mxu0
    %v199 = vadd.f32 %v73, %v198
    %v200 = vpop.f32.mrb[0].mxu0
    %v201 = vadd.f32 %v69, %v200
    %v202 = vpop.f32.mrb[0].mxu0
    %v203 = vadd.f32 %v73, %v202
    %204 = vdwg.mxu0
    %v205 = vsub.f32 0.0, %v197
    %v206 = vsub.f32 0.0, %v199
    %v207 = vsub.f32 0.0, %v201
    %v208 = vsub.f32 0.0, %v203
    %v209 = vmul.f32 %v205, 1.442695
    %v210 = vpow.pop %v209
    %v211 = vmul.f32 %v206, 1.442695
    %v212 = vpow.pop %v211
    %v213 = vmul.f32 %v207, 1.442695
    %v214 = vpow.pop %v213
    %v215 = vmul.f32 %v208, 1.442695
    %v216 = vpow.pop %v215
    %v217 = vadd.f32 %v210, 1.0
    %v218 = vadd.f32 %v212, 1.0
    %v219 = vadd.f32 %v214, 1.0
    %v220 = vadd.f32 %v216, 1.0
    %v221 = vrcp.pop %v217
    %v222 = vrcp.pop %v218
    %v223 = vrcp.pop %v219
    %v224 = vrcp.pop %v220
    %225 = vst [vmem:[#allocation7] sm:$0xff] %v221
    %226 = vst [vmem:[#allocation7 + $0x8] sm:$0xff] %v222
    %227 = vst [vmem:[#allocation7 + $0x10] sm:$0xff] %v223
    %228 = vst [vmem:[#allocation7 + $0x18] sm:$0xff] %v224
    // Predicated region
    $region22: #{tpu_custom_call.1} parent=1 // pred_check
      _
    $region23: #{tpu_custom_call.1} parent=1 // pred_check_branch
      %230 = sbr.rel (0) target = $region25
    $region24: #{tpu_custom_call.1} parent=1 // pred_region
      %s232 = ssub.s32 512, 512
      %233 = vsyncadd [#allocation4], %s232
      %s234 = sshll.u32 [#allocation7], 4
      %s235 = int_to_ptr.vmem [resolvable:$true] %s234
      %240 = dma.vmem_to_hbm [thread:$0]  %s235, 512, %s3, [#allocation4], 256, 256, 16
    $region25: #{tpu_custom_call.1} parent=1 // pred_fallthru
      _
    // Predicated region
    $region26: #{tpu_custom_call.1} parent=1 // pred_check
      _
    $region27: #{tpu_custom_call.1} parent=1 // pred_check_branch
      %242 = sbr.rel (0) target = $region29
    $region28: #{tpu_custom_call.1} parent=1 // pred_region
      %243 = dma.done [#allocation4], 512
    $region29: #{tpu_custom_call.1} parent=1 // pred_fallthru
      _
    %244 = vsyncpa [#allocation3], 1
    %245 = vsyncpa [#allocation6], 1
    %246 = vsyncpa [#allocation4], 1

</llo_original>
